<compile_context>
chip_gen: v7x
topology: tpu7x:2x2x1
jax: 0.10.0
libtpu: 0.0.40
codegen_flags: <defaults>
</compile_context>

<pallas_src>
import functools

import jax
import jax.numpy as jnp
from jax.experimental import pallas as pl
from jax.experimental.pallas import tpu as pltpu

LANE = 128


def _round_up(n, m):
    return ((n + m - 1) // m) * m


def _apply_act(h, act):
    if act == "relu":
        return jnp.maximum(h, 0.0)
    if act == "tanh":
        return jnp.tanh(h)
    if act == "sigmoid":
        return jax.nn.sigmoid(h)
    if act == "softplus":
        return jax.nn.softplus(h)
    if act == "none":
        return h
    raise ValueError(f"unknown activation {act!r}")


# ----------------------------- fused Pallas kernel ---------------------------
def _mlp_fused_kernel(x_ref, w_ref, b_ref, o_ref, *, activations):
    # x_ref: (B, D_pad)   w_ref: (L, D_pad, D_pad)   b_ref: (L, 1, D_pad)
    h = x_ref[...].astype(jnp.float32)
    for l, act in enumerate(activations):
        w = w_ref[l]            # static leading-axis view: (D_pad, D_pad)
        b = b_ref[l]            # (1, D_pad), broadcasts over batch
        h = jnp.dot(h, w, preferred_element_type=jnp.float32) + b
        h = _apply_act(h, act)
    o_ref[...] = h.astype(o_ref.dtype)


def mlp_forward(w_all, b_all, dims, x, nonlinearity="relu", act_last=None):
    """Whole-MLP forward in one pallas_call; returns [B, dims[-1]]."""
    n_layers = w_all.shape[0]
    d_pad = w_all.shape[-1]
    out_dim = dims[-1]
    activations = tuple(
        nonlinearity if l + 1 < n_layers
        else (act_last if act_last is not None else "none")
        for l in range(n_layers)
    )

    B, in_dim = x.shape
    # One-time lane padding of the input in the wrapper (plain XLA), never
    # inside the kernel.
    if in_dim != d_pad:
        x = jnp.pad(x, ((0, 0), (0, d_pad - in_dim)))

    def full_block(shape):
        nd = len(shape)
        return pl.BlockSpec(shape, lambda i, _n=nd: (0,) * _n)

    kernel = functools.partial(_mlp_fused_kernel, activations=activations)
    out = pl.pallas_call(
        kernel,
        out_shape=jax.ShapeDtypeStruct((B, d_pad), x.dtype),
        grid_spec=pl.GridSpec(
            grid=(1,),
            in_specs=[
                full_block(x.shape),
                full_block(w_all.shape),
                full_block(b_all.shape),
            ],
            out_specs=full_block((B, d_pad)),
        ),
        compiler_params=pltpu.CompilerParams(
            dimension_semantics=("arbitrary",),
        ),
    )(x, w_all, b_all)

    if out_dim != d_pad:
        out = out[:, :out_dim]
    return out


# ----------------------------- parameter init --------------------------------
def glorot_uniform(key, shape):
    # PyTorch nn.Linear weight is (out, in); the glorot limit uses the
    # symmetric sum fan_in + fan_out, so it is identical for the transposed
    # (in, out) layout stored here.
    fan_in, fan_out = shape
    limit = jnp.sqrt(6.0 / (fan_in + fan_out))
    return jax.random.uniform(key, shape, jnp.float32, -limit, limit)


def init_mlp_params(key, input_dim, hidden_dims_str):
    """Returns stacked, lane-padded (W_all, B_all) plus the true layer dims."""
    hidden_dims = tuple(int(h) for h in hidden_dims_str.split("-"))
    dims = (input_dim,) + hidden_dims
    n_layers = len(hidden_dims)
    d_pad = _round_up(max(dims), LANE)

    w_all = jnp.zeros((n_layers, d_pad, d_pad), jnp.float32)
    b_all = jnp.zeros((n_layers, 1, d_pad), jnp.float32)  # nn.Linear bias -> 0
    for l in range(n_layers):
        key, sub = jax.random.split(key)
        w = glorot_uniform(sub, (dims[l], dims[l + 1]))    # stored as W.T
        w_all = w_all.at[l, : dims[l], : dims[l + 1]].set(w)
    return w_all, b_all, dims


# ----------------------------- main ------------------------------------------
if __name__ == "__main__":
    key = jax.random.PRNGKey(0)
    key, xkey = jax.random.split(key)

    # NOTE(perf): the kernel is latency-bound up to B ~ 128-256; callers should
    # batch multiple MLP invocations into one x where possible.  Small B here
    # to keep the example tiny.
    batch = 8
    input_dim = 32
    hidden_dims = "64-64-16"
    nonlinearity = "relu"
    act_last = None  # MLP(..., act_last=None): no activation after last layer

    x = jax.random.normal(xkey, (batch, input_dim), dtype=jnp.float32)
    w_all, b_all, dims = init_mlp_params(key, input_dim, hidden_dims)

    out = mlp_forward(w_all, b_all, dims, x,
                      nonlinearity=nonlinearity, act_last=act_last)
    out = jax.block_until_ready(out)

    # Reference in plain JAX using the UNPADDED sub-blocks of the stacked
    # params, i.e. the original MLP math.
    n_layers = w_all.shape[0]
    ref = x
    for l in range(n_layers):
        w = w_all[l, : dims[l], : dims[l + 1]]
        b = b_all[l, 0, : dims[l + 1]]
        ref = ref @ w + b
        if l + 1 < n_layers:
            ref = jnp.maximum(ref, 0.0)          # hidden relu
        # act_last is None -> no activation on the last layer

    assert out.shape == (batch, dims[-1])
    assert jnp.allclose(out, ref, atol=1e-5, rtol=1e-5)

    print("KERNEL_OK")
</pallas_src>

<mosaic_0001>
module attributes {stable_mosaic.version = 11 : i64} {
  func.func @_mlp_fused_kernel(%arg0: i32, %arg1: memref<8x128xf32, #tpu.memory_space<vmem>>, %arg2: memref<3x128x128xf32, #tpu.memory_space<vmem>>, %arg3: memref<3x1x128xf32, #tpu.memory_space<vmem>>, %arg4: memref<8x128xf32, #tpu.memory_space<vmem>>) attributes {dimension_semantics = [#tpu.dimension_semantics<arbitrary>], iteration_bounds = array<i64: 1>, scalar_prefetch = 0 : i64, scratch_operands = 0 : i64, tpu.core_type = #tpu.core_type<tc>, window_params = [{pipeline_mode = #tpu.pipeline_mode<synchronous>, transform_indices = @transform_0, window_bounds = array<i64: 8, 128>}, {pipeline_mode = #tpu.pipeline_mode<synchronous>, transform_indices = @transform_1, window_bounds = array<i64: 3, 128, 128>}, {pipeline_mode = #tpu.pipeline_mode<synchronous>, transform_indices = @transform_2, window_bounds = array<i64: 3, 1, 128>}, {pipeline_mode = #tpu.pipeline_mode<synchronous>, transform_indices = @transform_3, window_bounds = array<i64: 8, 128>}]} {
    %c0 = arith.constant 0 : index
    %c0_0 = arith.constant 0 : index
    %0 = vector.load %arg1[%c0, %c0_0] : memref<8x128xf32, #tpu.memory_space<vmem>>, vector<8x128xf32>
    %c0_1 = arith.constant 0 : index
    %c0_2 = arith.constant 0 : index
    %c0_3 = arith.constant 0 : index
    %1 = vector.load %arg2[%c0_1, %c0_2, %c0_3] : memref<3x128x128xf32, #tpu.memory_space<vmem>>, vector<1x128x128xf32>
    %2 = vector.shape_cast %1 : vector<1x128x128xf32> to vector<128x128xf32>
    %c0_4 = arith.constant 0 : index
    %c0_5 = arith.constant 0 : index
    %c0_6 = arith.constant 0 : index
    %3 = vector.load %arg3[%c0_4, %c0_5, %c0_6] : memref<3x1x128xf32, #tpu.memory_space<vmem>>, vector<1x1x128xf32>
    %4 = vector.shape_cast %3 : vector<1x1x128xf32> to vector<1x128xf32>
    %cst = arith.constant dense<0.000000e+00> : vector<8x128xf32>
    %5 = tpu.matmul %0, %2, %cst {dimension_numbers = #tpu.dot_dimension_numbers<[1], [0], [0], [1], [0, 0, 1, 1], [], []>} : vector<8x128xf32>, vector<128x128xf32>, vector<8x128xf32> -> vector<8x128xf32>
    %6 = vector.broadcast %4 : vector<1x128xf32> to vector<8x128xf32>
    %7 = arith.addf %5, %6 : vector<8x128xf32>
    %cst_7 = arith.constant 0.000000e+00 : f32
    %8 = vector.broadcast %cst_7 : f32 to vector<8x128xf32>
    %9 = arith.maximumf %7, %8 : vector<8x128xf32>
    %c1 = arith.constant 1 : index
    %c0_8 = arith.constant 0 : index
    %c0_9 = arith.constant 0 : index
    %10 = vector.load %arg2[%c1, %c0_8, %c0_9] : memref<3x128x128xf32, #tpu.memory_space<vmem>>, vector<1x128x128xf32>
    %11 = vector.shape_cast %10 : vector<1x128x128xf32> to vector<128x128xf32>
    %c1_10 = arith.constant 1 : index
    %c0_11 = arith.constant 0 : index
    %c0_12 = arith.constant 0 : index
    %12 = vector.load %arg3[%c1_10, %c0_11, %c0_12] : memref<3x1x128xf32, #tpu.memory_space<vmem>>, vector<1x1x128xf32>
    %13 = vector.shape_cast %12 : vector<1x1x128xf32> to vector<1x128xf32>
    %cst_13 = arith.constant dense<0.000000e+00> : vector<8x128xf32>
    %14 = tpu.matmul %9, %11, %cst_13 {dimension_numbers = #tpu.dot_dimension_numbers<[1], [0], [0], [1], [0, 0, 1, 1], [], []>} : vector<8x128xf32>, vector<128x128xf32>, vector<8x128xf32> -> vector<8x128xf32>
    %15 = vector.broadcast %13 : vector<1x128xf32> to vector<8x128xf32>
    %16 = arith.addf %14, %15 : vector<8x128xf32>
    %cst_14 = arith.constant 0.000000e+00 : f32
    %17 = vector.broadcast %cst_14 : f32 to vector<8x128xf32>
    %18 = arith.maximumf %16, %17 : vector<8x128xf32>
    %c2 = arith.constant 2 : index
    %c0_15 = arith.constant 0 : index
    %c0_16 = arith.constant 0 : index
    %19 = vector.load %arg2[%c2, %c0_15, %c0_16] : memref<3x128x128xf32, #tpu.memory_space<vmem>>, vector<1x128x128xf32>
    %20 = vector.shape_cast %19 : vector<1x128x128xf32> to vector<128x128xf32>
    %c2_17 = arith.constant 2 : index
    %c0_18 = arith.constant 0 : index
    %c0_19 = arith.constant 0 : index
    %21 = vector.load %arg3[%c2_17, %c0_18, %c0_19] : memref<3x1x128xf32, #tpu.memory_space<vmem>>, vector<1x1x128xf32>
    %22 = vector.shape_cast %21 : vector<1x1x128xf32> to vector<1x128xf32>
    %cst_20 = arith.constant dense<0.000000e+00> : vector<8x128xf32>
    %23 = tpu.matmul %18, %20, %cst_20 {dimension_numbers = #tpu.dot_dimension_numbers<[1], [0], [0], [1], [0, 0, 1, 1], [], []>} : vector<8x128xf32>, vector<128x128xf32>, vector<8x128xf32> -> vector<8x128xf32>
    %24 = vector.broadcast %22 : vector<1x128xf32> to vector<8x128xf32>
    %25 = arith.addf %23, %24 : vector<8x128xf32>
    %c0_21 = arith.constant 0 : index
    %c0_22 = arith.constant 0 : index
    %26 = vector.load %arg4[%c0_21, %c0_22] : memref<8x128xf32, #tpu.memory_space<vmem>>, vector<8x128xf32>
    tpu.vector_store %arg4[%c0_21, %c0_22], %25 {strides = array<i32>} : memref<8x128xf32, #tpu.memory_space<vmem>>, vector<8x128xf32>,
    return
  }
  func.func @transform_0(%arg0: i32) -> (i32, i32) {
    %c0_i32 = arith.constant 0 : i32
    %c0_i32_0 = arith.constant 0 : i32
    %c0_i32_1 = arith.constant 0 : i32
    return %c0_i32, %c0_i32_0 : i32, i32
  }
  func.func @transform_1(%arg0: i32) -> (i32, i32, i32) {
    %c0_i32 = arith.constant 0 : i32
    %c0_i32_0 = arith.constant 0 : i32
    %c0_i32_1 = arith.constant 0 : i32
    %c0_i32_2 = arith.constant 0 : i32
    return %c0_i32, %c0_i32_0, %c0_i32_1 : i32, i32, i32
  }
  func.func @transform_2(%arg0: i32) -> (i32, i32, i32) {
    %c0_i32 = arith.constant 0 : i32
    %c0_i32_0 = arith.constant 0 : i32
    %c0_i32_1 = arith.constant 0 : i32
    %c0_i32_2 = arith.constant 0 : i32
    return %c0_i32, %c0_i32_0, %c0_i32_1 : i32, i32, i32
  }
  func.func @transform_3(%arg0: i32) -> (i32, i32) {
    %c0_i32 = arith.constant 0 : i32
    %c0_i32_0 = arith.constant 0 : i32
    %c0_i32_1 = arith.constant 0 : i32
    return %c0_i32, %c0_i32_0 : i32, i32
  }
}

</mosaic_0001>

<llo_original>
// kernel: tpu_custom_call.1
$region0: #{tpu_custom_call.1}
  #allocation0 [shape = 'u32[]', space=smem, size = 0x4, offset = 0x4, fixed_abs, tag = 'smem constant byte address 0x4 - core index']
  #allocation1 [shape = 'u32[144,128]{1,0:T(1,128)}', space=vmem, size = 0x12000, scoped, tag = 'internal scratch']
  %s0 = inlined_call_operand.hbm [shape: f32[8,128], index: 0, kind: input, shape index: {}]
  %s1 = inlined_call_operand.hbm [shape: f32[3,128,128], index: 1, kind: input, shape index: {}]
  %s2 = inlined_call_operand.vmem [shape: f32[3,1,128], index: 2, kind: input, shape index: {}]
  %s3 = inlined_call_operand.hbm [shape: f32[8,128], index: 3, kind: output, shape index: {}]
  %s4 = sld [smem:[#allocation0]]
  $region30: #{tpu_custom_call.1} parent=0
    _
  %s6 = ssub.s32 1, %s4
  %s7 = scalar_select 0, %s6, %s4
  $region1: #{tpu_custom_call.1} parent=0
    #allocation2 [shape = 'u8[4096]{0}', space=vmem, size = 0x1000, scoped, tag = 'input window, operand 0, single buffered']
    #allocation3 [shape = 's32[1]{0}', space=sflag, size = 0x4, scoped, tag = 'scoped memory for tpu_custom_call.1']
    #allocation4 [shape = 's32[1]{0}', space=sflag, size = 0x4, scoped, tag = 'scoped memory for tpu_custom_call.1']
    #allocation5 [shape = 'u8[196608]{0}', space=vmem, size = 0x30000, scoped, tag = 'input window, operand 1, single buffered']
    #allocation6 [shape = 's32[1]{0}', space=sflag, size = 0x4, scoped, tag = 'scoped memory for tpu_custom_call.1']
    #allocation7 [shape = 'u8[4096]{0}', space=vmem, size = 0x1000, scoped, tag = 'output window, operand 0, single buffered']
    %8 = vsyncpa [#allocation3], 0
    %9 = vsyncpa [#allocation6], 0
    %10 = vsyncpa [#allocation4], 0
    // Predicated region
    $region2: #{tpu_custom_call.1} parent=1 // pred_check
      _
    $region3: #{tpu_custom_call.1} parent=1 // pred_check_branch
      %12 = sbr.rel (0) target = $region5
    $region4: #{tpu_custom_call.1} parent=1 // pred_region
      %s14 = ssub.s32 128, 128
      %15 = vsyncadd [#allocation3], %s14
      %s17 = sshll.u32 [#allocation2], 4
      %s18 = int_to_ptr.vmem [resolvable:$true] %s17
      %20 = dma.hbm_to_vmem [thread:$0]  %s0, 128, %s18, [#allocation3]
    $region5: #{tpu_custom_call.1} parent=1 // pred_fallthru
      _
    // Predicated region
    $region6: #{tpu_custom_call.1} parent=1 // pred_check
      _
    $region7: #{tpu_custom_call.1} parent=1 // pred_check_branch
      %22 = sbr.rel (0) target = $region9
    $region8: #{tpu_custom_call.1} parent=1 // pred_region
      %s24 = ssub.s32 6144, 6144
      %25 = vsyncadd [#allocation6], %s24
      %s26 = sshll.u32 [#allocation5], 4
      %s27 = int_to_ptr.vmem [resolvable:$true] %s26
      %32 = dma.hbm_to_vmem [thread:$0]  %s1, 6144, %s27, [#allocation6], 128, 128, 8
    $region9: #{tpu_custom_call.1} parent=1 // pred_fallthru
      _
    // Predicated region
    $region10: #{tpu_custom_call.1} parent=1 // pred_check
      _
    $region11: #{tpu_custom_call.1} parent=1 // pred_check_branch
      %34 = sbr.rel (0) target = $region13
    $region12: #{tpu_custom_call.1} parent=1 // pred_region
      _
    $region13: #{tpu_custom_call.1} parent=1 // pred_fallthru
      _
    // Predicated region
    $region14: #{tpu_custom_call.1} parent=1 // pred_check
      _
    $region15: #{tpu_custom_call.1} parent=1 // pred_check_branch
      %36 = sbr.rel (0) target = $region17
    $region16: #{tpu_custom_call.1} parent=1 // pred_region
      %37 = dma.done [#allocation3], 128
    $region17: #{tpu_custom_call.1} parent=1 // pred_fallthru
      _
    // Predicated region
    $region18: #{tpu_custom_call.1} parent=1 // pred_check
      _
    $region19: #{tpu_custom_call.1} parent=1 // pred_check_branch
      %39 = sbr.rel (0) target = $region21
    $region20: #{tpu_custom_call.1} parent=1 // pred_region
      %40 = dma.done [#allocation6], 6144
    $region21: #{tpu_custom_call.1} parent=1 // pred_fallthru
      _
    %v41 = vld [vmem:[#allocation2] sm:$0xff]
    %v42 = vld [vmem:[#allocation5] sm:$0xff]
    %v43 = vld [vmem:[#allocation5 + $0x8] sm:$0xff]
    %v44 = vld [vmem:[#allocation5 + $0x10] sm:$0xff]
    %v45 = vld [vmem:[#allocation5 + $0x18] sm:$0xff]
    %v46 = vld [vmem:[#allocation5 + $0x20] sm:$0xff]
    %v47 = vld [vmem:[#allocation5 + $0x28] sm:$0xff]
    %v48 = vld [vmem:[#allocation5 + $0x30] sm:$0xff]
    %v49 = vld [vmem:[#allocation5 + $0x38] sm:$0xff]
    %v50 = vld [vmem:[#allocation5 + $0x40] sm:$0xff]
    %v51 = vld [vmem:[#allocation5 + $0x48] sm:$0xff]
    %v52 = vld [vmem:[#allocation5 + $0x50] sm:$0xff]
    %v53 = vld [vmem:[#allocation5 + $0x58] sm:$0xff]
    %v54 = vld [vmem:[#allocation5 + $0x60] sm:$0xff]
    %v55 = vld [vmem:[#allocation5 + $0x68] sm:$0xff]
    %v56 = vld [vmem:[#allocation5 + $0x70] sm:$0xff]
    %v57 = vld [vmem:[#allocation5 + $0x78] sm:$0xff]
    %v58 = vld [vmem:[%s2] sm:$0x1]
    %v60 = vlaneseq
    %v61 = vshrl.u32 %v60, 7
    %v62 = vsub.s32 0, %v61
    %v63 = vrot.slane %v58, %v62
    %65 = vmatprep.subr.mxu0 0.0
    %66 = vmatpush1.msra.mxu0 %v42
    %67 = vmatprep.subr.mxu0 0.0
    %68 = vmatpush1.msra.mxu0 %v43
    %69 = vmatprep.subr.mxu0 0.0
    %70 = vmatpush1.msra.mxu0 %v44
    %71 = vmatprep.subr.mxu0 0.0
    %72 = vmatpush1.msra.mxu0 %v45
    %73 = vmatprep.subr.mxu0 0.0
    %74 = vmatpush1.msra.mxu0 %v46
    %75 = vmatprep.subr.mxu0 0.0
    %76 = vmatpush1.msra.mxu0 %v47
    %77 = vmatprep.subr.mxu0 0.0
    %78 = vmatpush1.msra.mxu0 %v48
    %79 = vmatprep.subr.mxu0 0.0
    %80 = vmatpush1.msra.mxu0 %v49
    %81 = vmatprep.subr.mxu0 0.0
    %82 = vmatpush1.msra.mxu0 %v50
    %83 = vmatprep.subr.mxu0 0.0
    %84 = vmatpush1.msra.mxu0 %v51
    %85 = vmatprep.subr.mxu0 0.0
    %86 = vmatpush1.msra.mxu0 %v52
    %87 = vmatprep.subr.mxu0 0.0
    %88 = vmatpush1.msra.mxu0 %v53
    %89 = vmatprep.subr.mxu0 0.0
    %90 = vmatpush1.msra.mxu0 %v54
    %91 = vmatprep.subr.mxu0 0.0
    %92 = vmatpush1.msra.mxu0 %v55
    %93 = vmatprep.subr.mxu0 0.0
    %94 = vmatpush1.msra.mxu0 %v56
    %95 = vmatprep.subr.mxu0 0.0
    %96 = vmatpush1.msra.mxu0 %v57
    %97 = vmatprep.subr.mxu0 0.0
    %98 = vmatpush1.msra.mxu0 0.0
    %99 = vmatprep.subr.mxu0 0.0
    %100 = vmatpush1.msra.mxu0 0.0
    %101 = vmatprep.subr.mxu0 0.0
    %102 = vmatpush1.msra.mxu0 0.0
    %103 = vmatprep.subr.mxu0 0.0
    %104 = vmatpush1.msra.mxu0 0.0
    %105 = vmatprep.subr.mxu0 0.0
    %106 = vmatpush1.msra.mxu0 0.0
    %107 = vmatprep.subr.mxu0 0.0
    %108 = vmatpush1.msra.mxu0 0.0
    %109 = vmatprep.subr.mxu0 0.0
    %110 = vmatpush1.msra.mxu0 0.0
    %111 = vmatprep.subr.mxu0 0.0
    %112 = vmatpush1.msra.mxu0 0.0
    %113 = vmatprep.subr.mxu0 0.0
    %114 = vmatpush1.msra.mxu0 0.0
    %115 = vmatprep.subr.mxu0 0.0
    %116 = vmatpush1.msra.mxu0 0.0
    %117 = vmatprep.subr.mxu0 0.0
    %118 = vmatpush1.msra.mxu0 0.0
    %119 = vmatprep.subr.mxu0 0.0
    %120 = vmatpush1.msra.mxu0 0.0
    %121 = vmatprep.subr.mxu0 0.0
    %122 = vmatpush1.msra.mxu0 0.0
    %123 = vmatprep.subr.mxu0 0.0
    %124 = vmatpush1.msra.mxu0 0.0
    %125 = vmatprep.subr.mxu0 0.0
    %126 = vmatpush1.msra.mxu0 0.0
    %127 = vmatprep.subr.mxu0 0.0
    %128 = vmatpush1.msra.mxu0 0.0
    %129 = vmatprep.mubr.f32.mxu0 0.0
    %130 = vmatmul.mubr.f32.gmra.mrb[0].mxu0 %v41
    %v131 = vpop.f32.mrb[0].mxu0
    %v132 = vadd.f32 %v63, %v131
    %v133 = vpop.f32.mrb[0].mxu0
    %134 = vdwg.mxu0
    %v135 = vmax.f32 %v132, 0.0
    %s136 = scalar_lea.vmem [#allocation5], 128
    %v137 = vld [vmem:[%s136] sm:$0xff]
    %v138 = vld [vmem:[%s136 + $0x8] sm:$0xff]
    %v139 = vld [vmem:[%s136 + $0x10] sm:$0xff]
    %v140 = vld [vmem:[%s136 + $0x18] sm:$0xff]
    %v141 = vld [vmem:[%s136 + $0x20] sm:$0xff]
    %v142 = vld [vmem:[%s136 + $0x28] sm:$0xff]
    %v143 = vld [vmem:[%s136 + $0x30] sm:$0xff]
    %v144 = vld [vmem:[%s136 + $0x38] sm:$0xff]
    %v145 = vld [vmem:[%s136 + $0x40] sm:$0xff]
    %v146 = vld [vmem:[%s136 + $0x48] sm:$0xff]
    %v147 = vld [vmem:[%s136 + $0x50] sm:$0xff]
    %v148 = vld [vmem:[%s136 + $0x58] sm:$0xff]
    %v149 = vld [vmem:[%s136 + $0x60] sm:$0xff]
    %v150 = vld [vmem:[%s136 + $0x68] sm:$0xff]
    %v151 = vld [vmem:[%s136 + $0x70] sm:$0xff]
    %v152 = vld [vmem:[%s136 + $0x78] sm:$0xff]
    %s153 = scalar_lea.vmem %s2, 1
    %v154 = vld [vmem:[%s153] sm:$0x1]
    %v156 = vlaneseq
    %v157 = vshrl.u32 %v156, 7
    %v158 = vsub.s32 0, %v157
    %v159 = vrot.slane %v154, %v158
    %161 = vmatprep.subr.mxu0 0.0
    %162 = vmatpush1.msra.mxu0 %v137
    %163 = vmatprep.subr.mxu0 0.0
    %164 = vmatpush1.msra.mxu0 %v138
    %165 = vmatprep.subr.mxu0 0.0
    %166 = vmatpush1.msra.mxu0 %v139
    %167 = vmatprep.subr.mxu0 0.0
    %168 = vmatpush1.msra.mxu0 %v140
    %169 = vmatprep.subr.mxu0 0.0
    %170 = vmatpush1.msra.mxu0 %v141
    %171 = vmatprep.subr.mxu0 0.0
    %172 = vmatpush1.msra.mxu0 %v142
    %173 = vmatprep.subr.mxu0 0.0
    %174 = vmatpush1.msra.mxu0 %v143
    %175 = vmatprep.subr.mxu0 0.0
    %176 = vmatpush1.msra.mxu0 %v144
    %177 = vmatprep.subr.mxu0 0.0
    %178 = vmatpush1.msra.mxu0 %v145
    %179 = vmatprep.subr.mxu0 0.0
    %180 = vmatpush1.msra.mxu0 %v146
    %181 = vmatprep.subr.mxu0 0.0
    %182 = vmatpush1.msra.mxu0 %v147
    %183 = vmatprep.subr.mxu0 0.0
    %184 = vmatpush1.msra.mxu0 %v148
    %185 = vmatprep.subr.mxu0 0.0
    %186 = vmatpush1.msra.mxu0 %v149
    %187 = vmatprep.subr.mxu0 0.0
    %188 = vmatpush1.msra.mxu0 %v150
    %189 = vmatprep.subr.mxu0 0.0
    %190 = vmatpush1.msra.mxu0 %v151
    %191 = vmatprep.subr.mxu0 0.0
    %192 = vmatpush1.msra.mxu0 %v152
    %193 = vmatprep.subr.mxu0 0.0
    %194 = vmatpush1.msra.mxu0 0.0
    %195 = vmatprep.subr.mxu0 0.0
    %196 = vmatpush1.msra.mxu0 0.0
    %197 = vmatprep.subr.mxu0 0.0
    %198 = vmatpush1.msra.mxu0 0.0
    %199 = vmatprep.subr.mxu0 0.0
    %200 = vmatpush1.msra.mxu0 0.0
    %201 = vmatprep.subr.mxu0 0.0
    %202 = vmatpush1.msra.mxu0 0.0
    %203 = vmatprep.subr.mxu0 0.0
    %204 = vmatpush1.msra.mxu0 0.0
    %205 = vmatprep.subr.mxu0 0.0
    %206 = vmatpush1.msra.mxu0 0.0
    %207 = vmatprep.subr.mxu0 0.0
    %208 = vmatpush1.msra.mxu0 0.0
    %209 = vmatprep.subr.mxu0 0.0
    %210 = vmatpush1.msra.mxu0 0.0
    %211 = vmatprep.subr.mxu0 0.0
    %212 = vmatpush1.msra.mxu0 0.0
    %213 = vmatprep.subr.mxu0 0.0
    %214 = vmatpush1.msra.mxu0 0.0
    %215 = vmatprep.subr.mxu0 0.0
    %216 = vmatpush1.msra.mxu0 0.0
    %217 = vmatprep.subr.mxu0 0.0
    %218 = vmatpush1.msra.mxu0 0.0
    %219 = vmatprep.subr.mxu0 0.0
    %220 = vmatpush1.msra.mxu0 0.0
    %221 = vmatprep.subr.mxu0 0.0
    %222 = vmatpush1.msra.mxu0 0.0
    %223 = vmatprep.subr.mxu0 0.0
    %224 = vmatpush1.msra.mxu0 0.0
    %225 = vmatprep.mubr.f32.mxu0 0.0
    %226 = vmatmul.mubr.f32.gmra.mrb[0].mxu0 %v135
    %v227 = vpop.f32.mrb[0].mxu0
    %v228 = vadd.f32 %v159, %v227
    %v229 = vpop.f32.mrb[0].mxu0
    %230 = vdwg.mxu0
    %v231 = vmax.f32 %v228, 0.0
    %s232 = scalar_lea.vmem [#allocation5], 256
    %v233 = vld [vmem:[%s232] sm:$0xff]
    %v234 = vld [vmem:[%s232 + $0x8] sm:$0xff]
    %v235 = vld [vmem:[%s232 + $0x10] sm:$0xff]
    %v236 = vld [vmem:[%s232 + $0x18] sm:$0xff]
    %v237 = vld [vmem:[%s232 + $0x20] sm:$0xff]
    %v238 = vld [vmem:[%s232 + $0x28] sm:$0xff]
    %v239 = vld [vmem:[%s232 + $0x30] sm:$0xff]
    %v240 = vld [vmem:[%s232 + $0x38] sm:$0xff]
    %v241 = vld [vmem:[%s232 + $0x40] sm:$0xff]
    %v242 = vld [vmem:[%s232 + $0x48] sm:$0xff]
    %v243 = vld [vmem:[%s232 + $0x50] sm:$0xff]
    %v244 = vld [vmem:[%s232 + $0x58] sm:$0xff]
    %v245 = vld [vmem:[%s232 + $0x60] sm:$0xff]
    %v246 = vld [vmem:[%s232 + $0x68] sm:$0xff]
    %v247 = vld [vmem:[%s232 + $0x70] sm:$0xff]
    %v248 = vld [vmem:[%s232 + $0x78] sm:$0xff]
    %s249 = scalar_lea.vmem %s2, 2
    %v250 = vld [vmem:[%s249] sm:$0x1]
    %v252 = vlaneseq
    %v253 = vshrl.u32 %v252, 7
    %v254 = vsub.s32 0, %v253
    %v255 = vrot.slane %v250, %v254
    %257 = vmatprep.subr.mxu0 0.0
    %258 = vmatpush1.msra.mxu0 %v233
    %259 = vmatprep.subr.mxu0 0.0
    %260 = vmatpush1.msra.mxu0 %v234
    %261 = vmatprep.subr.mxu0 0.0
    %262 = vmatpush1.msra.mxu0 %v235
    %263 = vmatprep.subr.mxu0 0.0
    %264 = vmatpush1.msra.mxu0 %v236
    %265 = vmatprep.subr.mxu0 0.0
    %266 = vmatpush1.msra.mxu0 %v237
    %267 = vmatprep.subr.mxu0 0.0
    %268 = vmatpush1.msra.mxu0 %v238
    %269 = vmatprep.subr.mxu0 0.0
    %270 = vmatpush1.msra.mxu0 %v239
    %271 = vmatprep.subr.mxu0 0.0
    %272 = vmatpush1.msra.mxu0 %v240
    %273 = vmatprep.subr.mxu0 0.0
    %274 = vmatpush1.msra.mxu0 %v241
    %275 = vmatprep.subr.mxu0 0.0
    %276 = vmatpush1.msra.mxu0 %v242
    %277 = vmatprep.subr.mxu0 0.0
    %278 = vmatpush1.msra.mxu0 %v243
    %279 = vmatprep.subr.mxu0 0.0
    %280 = vmatpush1.msra.mxu0 %v244
    %281 = vmatprep.subr.mxu0 0.0
    %282 = vmatpush1.msra.mxu0 %v245
    %283 = vmatprep.subr.mxu0 0.0
    %284 = vmatpush1.msra.mxu0 %v246
    %285 = vmatprep.subr.mxu0 0.0
    %286 = vmatpush1.msra.mxu0 %v247
    %287 = vmatprep.subr.mxu0 0.0
    %288 = vmatpush1.msra.mxu0 %v248
    %289 = vmatprep.subr.mxu0 0.0
    %290 = vmatpush1.msra.mxu0 0.0
    %291 = vmatprep.subr.mxu0 0.0
    %292 = vmatpush1.msra.mxu0 0.0
    %293 = vmatprep.subr.mxu0 0.0
    %294 = vmatpush1.msra.mxu0 0.0
    %295 = vmatprep.subr.mxu0 0.0
    %296 = vmatpush1.msra.mxu0 0.0
    %297 = vmatprep.subr.mxu0 0.0
    %298 = vmatpush1.msra.mxu0 0.0
    %299 = vmatprep.subr.mxu0 0.0
    %300 = vmatpush1.msra.mxu0 0.0
    %301 = vmatprep.subr.mxu0 0.0
    %302 = vmatpush1.msra.mxu0 0.0
    %303 = vmatprep.subr.mxu0 0.0
    %304 = vmatpush1.msra.mxu0 0.0
    %305 = vmatprep.subr.mxu0 0.0
    %306 = vmatpush1.msra.mxu0 0.0
    %307 = vmatprep.subr.mxu0 0.0
    %308 = vmatpush1.msra.mxu0 0.0
    %309 = vmatprep.subr.mxu0 0.0
    %310 = vmatpush1.msra.mxu0 0.0
    %311 = vmatprep.subr.mxu0 0.0
    %312 = vmatpush1.msra.mxu0 0.0
    %313 = vmatprep.subr.mxu0 0.0
    %314 = vmatpush1.msra.mxu0 0.0
    %315 = vmatprep.subr.mxu0 0.0
    %316 = vmatpush1.msra.mxu0 0.0
    %317 = vmatprep.subr.mxu0 0.0
    %318 = vmatpush1.msra.mxu0 0.0
    %319 = vmatprep.subr.mxu0 0.0
    %320 = vmatpush1.msra.mxu0 0.0
    %321 = vmatprep.mubr.f32.mxu0 0.0
    %322 = vmatmul.mubr.f32.gmra.mrb[0].mxu0 %v231
    %v323 = vpop.f32.mrb[0].mxu0
    %v324 = vadd.f32 %v255, %v323
    %v325 = vpop.f32.mrb[0].mxu0
    %326 = vdwg.mxu0
    %327 = vst [vmem:[#allocation7] sm:$0xff] %v324
    // Predicated region
    $region22: #{tpu_custom_call.1} parent=1 // pred_check
      _
    $region23: #{tpu_custom_call.1} parent=1 // pred_check_branch
      %329 = sbr.rel (0) target = $region25
    $region24: #{tpu_custom_call.1} parent=1 // pred_region
      %s331 = ssub.s32 128, 128
      %332 = vsyncadd [#allocation4], %s331
      %s334 = sshll.u32 [#allocation7], 4
      %s335 = int_to_ptr.vmem [resolvable:$true] %s334
      %337 = dma.vmem_to_hbm [thread:$0]  %s335, 128, %s3, [#allocation4]
    $region25: #{tpu_custom_call.1} parent=1 // pred_fallthru
      _
    // Predicated region
    $region26: #{tpu_custom_call.1} parent=1 // pred_check
      _
    $region27: #{tpu_custom_call.1} parent=1 // pred_check_branch
      %339 = sbr.rel (0) target = $region29
    $region28: #{tpu_custom_call.1} parent=1 // pred_region
      %340 = dma.done [#allocation4], 128
    $region29: #{tpu_custom_call.1} parent=1 // pred_fallthru
      _
    %341 = vsyncpa [#allocation3], 1
    %342 = vsyncpa [#allocation6], 1
    %343 = vsyncpa [#allocation4], 1

</llo_original>
